<compile_context>
chip_gen: v7x
topology: tpu7x:2x2x1
jax: 0.10.0
libtpu: 0.0.40
codegen_flags: <defaults>
</compile_context>

<pallas_src>
import functools

import jax
import jax.numpy as jnp
from jax.experimental import pallas as pl
from jax.experimental.pallas import tpu as pltpu

LANE = 128
SUB = 8


def _ce_kernel(x_ref, t_ref, loss_ref, cnt_ref, acc_ref, cntacc_ref, *,
               n_classes, ms_total, tm_sub):
    ti = pl.program_id(1)
    last = pl.num_programs(1) - 1

    @pl.when(ti == 0)
    def _():
        acc_ref[...] = jnp.zeros_like(acc_ref)
        cntacc_ref[...] = jnp.zeros_like(cntacc_ref)

    tgt = t_ref[...]                                     # (TM_SUB, 128) int32

    # running max over the (small, static) class axis -- pure VPU
    xmax = x_ref[0].astype(jnp.float32)
    for c in range(1, n_classes):
        xmax = jnp.maximum(xmax, x_ref[c].astype(jnp.float32))

    # exp-sum + "gather" of logits[target] via per-class select -- VPU + EUP
    esum = jnp.zeros_like(xmax)
    picked = jnp.zeros_like(xmax)
    for c in range(n_classes):
        xc = x_ref[c].astype(jnp.float32)
        esum = esum + jnp.exp(xc - xmax)
        picked = jnp.where(tgt == c, xc, picked)

    loss_px = xmax + jnp.log(esum) - picked              # (TM_SUB, 128)
    # label validity: also implements ignore_index=-100 and wrapper padding
    valid = (tgt >= 0) & (tgt < n_classes)

    if ms_total % tm_sub == 0:
        # no partial tail tile exists -> unmasked hot path everywhere
        acc_ref[...] += jnp.where(valid, loss_px, 0.0)
        cntacc_ref[...] += valid.astype(jnp.float32)
    else:
        @pl.when(ti != last)
        def _():
            acc_ref[...] += jnp.where(valid, loss_px, 0.0)
            cntacc_ref[...] += valid.astype(jnp.float32)

        @pl.when(ti == last)
        def _():
            # positional row mask only on the (partial) tail tile
            row = jax.lax.broadcasted_iota(jnp.int32, tgt.shape, 0)
            v = valid & ((ti * tm_sub + row) < ms_total)
            acc_ref[...] += jnp.where(v, loss_px, 0.0)
            cntacc_ref[...] += v.astype(jnp.float32)

    @pl.when(ti == last)
    def _():
        # single deferred XLU reduce per image
        loss_ref[...] = jnp.full((1, 1), jnp.sum(acc_ref[...]), jnp.float32)
        cnt_ref[...] = jnp.full((1, 1), jnp.sum(cntacc_ref[...]), jnp.float32)


def _round_up(x, m):
    return ((x + m - 1) // m) * m


def ce_loss(logits_nchw, target_nhw, *, vmem_budget_bytes=12 * 1024 * 1024):
    """Cross-entropy loss matching nn.CrossEntropyLoss() (mean reduction)."""
    N, C, H, W = logits_nchw.shape
    M = H * W

    x = logits_nchw.reshape(N, C, M)
    t = target_nhw.reshape(N, M).astype(jnp.int32)

    # Pad the pixel count to a multiple of 128 (lane width) and to at least
    # 8*128 so a dense (MS, 128) view exists.  Padded pixels get target = -1,
    # which the in-kernel label check excludes.  For typical nnU-Net patch
    # sizes H*W is already a multiple of 1024 -> free reshape, no copy.
    # TODO(synk): when H*W % 128 != 0 this pad copies logits once in XLA.
    M_pad = max(_round_up(M, LANE), SUB * LANE)
    if M_pad != M:
        x = jnp.pad(x, ((0, 0), (0, 0), (0, M_pad - M)))
        t = jnp.pad(t, ((0, 0), (0, M_pad - M)), constant_values=-1)
    MS = M_pad // LANE

    x4 = x.reshape(N, C, MS, LANE)   # free view (row-major contiguous)
    t3 = t.reshape(N, MS, LANE)      # free view

    # Tile size: as many 128-pixel sublane rows as the VMEM budget allows.
    # Per-row bytes: logits (2x buffered) + targets (2x buffered) + two f32
    # accumulators + headroom for compiler temporaries.
    bytes_per_row = (2 * C + 2 + 8) * LANE * 4
    desired = (vmem_budget_bytes // bytes_per_row) // SUB * SUB
    desired = max(SUB, min(2048, desired))               # <= ~256K px / tile
    tm_sub = max(SUB, min(desired, (MS // SUB) * SUB))
    tiles = pl.cdiv(MS, tm_sub)

    loss_part, cnt_part = pl.pallas_call(
        functools.partial(_ce_kernel, n_classes=C, ms_total=MS, tm_sub=tm_sub),
        out_shape=(
            jax.ShapeDtypeStruct((N, 1, 1), jnp.float32),
            jax.ShapeDtypeStruct((N, 1, 1), jnp.float32),
        ),
        grid_spec=pltpu.PrefetchScalarGridSpec(
            num_scalar_prefetch=0,
            grid=(N, tiles),
            in_specs=[
                pl.BlockSpec((None, C, tm_sub, LANE), lambda n, i: (n, 0, i, 0)),
                pl.BlockSpec((None, tm_sub, LANE), lambda n, i: (n, i, 0)),
            ],
            out_specs=(
                pl.BlockSpec((None, 1, 1), lambda n, i: (n, 0, 0)),
                pl.BlockSpec((None, 1, 1), lambda n, i: (n, 0, 0)),
            ),
            scratch_shapes=[
                pltpu.VMEM((tm_sub, LANE), jnp.float32),   # loss accumulator
                pltpu.VMEM((tm_sub, LANE), jnp.float32),   # count accumulator
            ],
        ),
        compiler_params=pltpu.CompilerParams(
            # per-image output blocks + per-image scratch reset make the image
            # axis safely "parallel" (2-TC split on v7x, no-op on v5e/v6e);
            # the pixel-tile axis carries the accumulator -> "arbitrary".
            dimension_semantics=("parallel", "arbitrary"),
            vmem_limit_bytes=32 * 1024 * 1024,
        ),
    )(x4, t3)

    # mean over non-ignored pixels (equals a plain mean when nothing is
    # ignored; 0/0 -> NaN matches PyTorch when every pixel is ignored).
    return jnp.sum(loss_part) / jnp.sum(cnt_part)


if __name__ == "__main__":
    key = jax.random.PRNGKey(0)
    k1, k2 = jax.random.split(key)

    N, C, H, W = 2, 4, 16, 16
    logits = jax.random.normal(k1, (N, C, H, W), dtype=jnp.float32)
    target = jax.random.randint(k2, (N, H, W), 0, C, dtype=jnp.int32)

    loss = jax.jit(ce_loss)(logits, target)
    loss = jax.block_until_ready(loss)

    # pure-JAX reference (same math as nn.CrossEntropyLoss, mean reduction)
    xm = jnp.transpose(logits, (0, 2, 3, 1)).reshape(-1, C)
    tflat = target.reshape(-1)
    lse = jax.scipy.special.logsumexp(xm, axis=-1)
    ref = jnp.mean(lse - xm[jnp.arange(xm.shape[0]), tflat])
    assert jnp.allclose(loss, ref, rtol=1e-5, atol=1e-5), (loss, ref)

    print("KERNEL_OK")
</pallas_src>

<mosaic_0001>
module attributes {stable_mosaic.version = 11 : i64} {
  func.func @_ce_kernel(%arg0: i32, %arg1: i32, %arg2: memref<1x4x8x128xf32, #tpu.memory_space<vmem>>, %arg3: memref<1x8x128xi32, #tpu.memory_space<vmem>>, %arg4: memref<1x1x1xf32, #tpu.memory_space<vmem>>, %arg5: memref<1x1x1xf32, #tpu.memory_space<vmem>>, %arg6: memref<8x128xf32, #tpu.memory_space<vmem>>, %arg7: memref<8x128xf32, #tpu.memory_space<vmem>>) attributes {dimension_semantics = [#tpu.dimension_semantics<parallel>, #tpu.dimension_semantics<arbitrary>], iteration_bounds = array<i64: 2, 1>, scalar_prefetch = 0 : i64, scratch_operands = 2 : i64, tpu.core_type = #tpu.core_type<tc>, window_params = [{transform_indices = @transform_0, window_bounds = array<i64: 1, 4, 8, 128>}, {transform_indices = @transform_1, window_bounds = array<i64: 1, 8, 128>}, {transform_indices = @transform_2, window_bounds = array<i64: 1, 1, 1>}, {transform_indices = @transform_3, window_bounds = array<i64: 1, 1, 1>}]} {
    %c0_i32 = arith.constant 0 : i32
    %0 = arith.cmpi eq, %arg1, %c0_i32 : i32
    %1 = arith.extui %0 : i1 to i32
    %c0_i32_0 = arith.constant 0 : i32
    %2 = arith.cmpi ne, %1, %c0_i32_0 : i32
    scf.if %2 {
      %cst_46 = arith.constant 0.000000e+00 : f32
      %71 = vector.broadcast %cst_46 : f32 to vector<8x128xf32>
      %c0_47 = arith.constant 0 : index
      %c0_48 = arith.constant 0 : index
      %72 = vector.load %arg6[%c0_47, %c0_48] : memref<8x128xf32, #tpu.memory_space<vmem>>, vector<8x128xf32>
      tpu.vector_store %arg6[%c0_47, %c0_48], %71 {strides = array<i32>} : memref<8x128xf32, #tpu.memory_space<vmem>>, vector<8x128xf32>,
      %cst_49 = arith.constant 0.000000e+00 : f32
      %73 = vector.broadcast %cst_49 : f32 to vector<8x128xf32>
      %c0_50 = arith.constant 0 : index
      %c0_51 = arith.constant 0 : index
      %74 = vector.load %arg7[%c0_50, %c0_51] : memref<8x128xf32, #tpu.memory_space<vmem>>, vector<8x128xf32>
      tpu.vector_store %arg7[%c0_50, %c0_51], %73 {strides = array<i32>} : memref<8x128xf32, #tpu.memory_space<vmem>>, vector<8x128xf32>,
    } else {
    }
    %c0 = arith.constant 0 : index
    %c0_1 = arith.constant 0 : index
    %c0_2 = arith.constant 0 : index
    %3 = vector.load %arg3[%c0, %c0_1, %c0_2] : memref<1x8x128xi32, #tpu.memory_space<vmem>>, vector<1x8x128xi32>
    %4 = vector.shape_cast %3 : vector<1x8x128xi32> to vector<8x128xi32>
    %c0_3 = arith.constant 0 : index
    %c0_4 = arith.constant 0 : index
    %c0_5 = arith.constant 0 : index
    %c0_6 = arith.constant 0 : index
    %5 = vector.load %arg2[%c0_3, %c0_4, %c0_5, %c0_6] : memref<1x4x8x128xf32, #tpu.memory_space<vmem>>, vector<1x1x8x128xf32>
    %6 = vector.shape_cast %5 : vector<1x1x8x128xf32> to vector<8x128xf32>
    %c0_7 = arith.constant 0 : index
    %c1 = arith.constant 1 : index
    %c0_8 = arith.constant 0 : index
    %c0_9 = arith.constant 0 : index
    %7 = vector.load %arg2[%c0_7, %c1, %c0_8, %c0_9] : memref<1x4x8x128xf32, #tpu.memory_space<vmem>>, vector<1x1x8x128xf32>
    %8 = vector.shape_cast %7 : vector<1x1x8x128xf32> to vector<8x128xf32>
    %9 = arith.maximumf %6, %8 : vector<8x128xf32>
    %c0_10 = arith.constant 0 : index
    %c2 = arith.constant 2 : index
    %c0_11 = arith.constant 0 : index
    %c0_12 = arith.constant 0 : index
    %10 = vector.load %arg2[%c0_10, %c2, %c0_11, %c0_12] : memref<1x4x8x128xf32, #tpu.memory_space<vmem>>, vector<1x1x8x128xf32>
    %11 = vector.shape_cast %10 : vector<1x1x8x128xf32> to vector<8x128xf32>
    %12 = arith.maximumf %9, %11 : vector<8x128xf32>
    %c0_13 = arith.constant 0 : index
    %c3 = arith.constant 3 : index
    %c0_14 = arith.constant 0 : index
    %c0_15 = arith.constant 0 : index
    %13 = vector.load %arg2[%c0_13, %c3, %c0_14, %c0_15] : memref<1x4x8x128xf32, #tpu.memory_space<vmem>>, vector<1x1x8x128xf32>
    %14 = vector.shape_cast %13 : vector<1x1x8x128xf32> to vector<8x128xf32>
    %15 = arith.maximumf %12, %14 : vector<8x128xf32>
    %cst = arith.constant 0.000000e+00 : f32
    %16 = vector.broadcast %cst : f32 to vector<8x128xf32>
    %cst_16 = arith.constant 0.000000e+00 : f32
    %17 = vector.broadcast %cst_16 : f32 to vector<8x128xf32>
    %c0_17 = arith.constant 0 : index
    %c0_18 = arith.constant 0 : index
    %c0_19 = arith.constant 0 : index
    %c0_20 = arith.constant 0 : index
    %18 = vector.load %arg2[%c0_17, %c0_18, %c0_19, %c0_20] : memref<1x4x8x128xf32, #tpu.memory_space<vmem>>, vector<1x1x8x128xf32>
    %19 = vector.shape_cast %18 : vector<1x1x8x128xf32> to vector<8x128xf32>
    %20 = arith.subf %19, %15 : vector<8x128xf32>
    %21 = math.exp %20 : vector<8x128xf32>
    %22 = arith.addf %16, %21 : vector<8x128xf32>
    %c0_i32_21 = arith.constant 0 : i32
    %23 = vector.broadcast %c0_i32_21 : i32 to vector<8x128xi32>
    %24 = arith.cmpi eq, %4, %23 : vector<8x128xi32>
    %25 = arith.select %24, %19, %17 : vector<8x128xi1>, vector<8x128xf32>
    %c0_22 = arith.constant 0 : index
    %c1_23 = arith.constant 1 : index
    %c0_24 = arith.constant 0 : index
    %c0_25 = arith.constant 0 : index
    %26 = vector.load %arg2[%c0_22, %c1_23, %c0_24, %c0_25] : memref<1x4x8x128xf32, #tpu.memory_space<vmem>>, vector<1x1x8x128xf32>
    %27 = vector.shape_cast %26 : vector<1x1x8x128xf32> to vector<8x128xf32>
    %28 = arith.subf %27, %15 : vector<8x128xf32>
    %29 = math.exp %28 : vector<8x128xf32>
    %30 = arith.addf %22, %29 : vector<8x128xf32>
    %c1_i32 = arith.constant 1 : i32
    %31 = vector.broadcast %c1_i32 : i32 to vector<8x128xi32>
    %32 = arith.cmpi eq, %4, %31 : vector<8x128xi32>
    %33 = arith.select %32, %27, %25 : vector<8x128xi1>, vector<8x128xf32>
    %c0_26 = arith.constant 0 : index
    %c2_27 = arith.constant 2 : index
    %c0_28 = arith.constant 0 : index
    %c0_29 = arith.constant 0 : index
    %34 = vector.load %arg2[%c0_26, %c2_27, %c0_28, %c0_29] : memref<1x4x8x128xf32, #tpu.memory_space<vmem>>, vector<1x1x8x128xf32>
    %35 = vector.shape_cast %34 : vector<1x1x8x128xf32> to vector<8x128xf32>
    %36 = arith.subf %35, %15 : vector<8x128xf32>
    %37 = math.exp %36 : vector<8x128xf32>
    %38 = arith.addf %30, %37 : vector<8x128xf32>
    %c2_i32 = arith.constant 2 : i32
    %39 = vector.broadcast %c2_i32 : i32 to vector<8x128xi32>
    %40 = arith.cmpi eq, %4, %39 : vector<8x128xi32>
    %41 = arith.select %40, %35, %33 : vector<8x128xi1>, vector<8x128xf32>
    %c0_30 = arith.constant 0 : index
    %c3_31 = arith.constant 3 : index
    %c0_32 = arith.constant 0 : index
    %c0_33 = arith.constant 0 : index
    %42 = vector.load %arg2[%c0_30, %c3_31, %c0_32, %c0_33] : memref<1x4x8x128xf32, #tpu.memory_space<vmem>>, vector<1x1x8x128xf32>
    %43 = vector.shape_cast %42 : vector<1x1x8x128xf32> to vector<8x128xf32>
    %44 = arith.subf %43, %15 : vector<8x128xf32>
    %45 = math.exp %44 : vector<8x128xf32>
    %46 = arith.addf %38, %45 : vector<8x128xf32>
    %c3_i32 = arith.constant 3 : i32
    %47 = vector.broadcast %c3_i32 : i32 to vector<8x128xi32>
    %48 = arith.cmpi eq, %4, %47 : vector<8x128xi32>
    %49 = arith.select %48, %43, %41 : vector<8x128xi1>, vector<8x128xf32>
    %50 = math.log %46 : vector<8x128xf32>
    %51 = arith.addf %15, %50 : vector<8x128xf32>
    %52 = arith.subf %51, %49 : vector<8x128xf32>
    %c0_i32_34 = arith.constant 0 : i32
    %53 = vector.broadcast %c0_i32_34 : i32 to vector<8x128xi32>
    %54 = arith.cmpi sge, %4, %53 : vector<8x128xi32>
    %c4_i32 = arith.constant 4 : i32
    %55 = vector.broadcast %c4_i32 : i32 to vector<8x128xi32>
    %56 = arith.cmpi slt, %4, %55 : vector<8x128xi32>
    %57 = arith.andi %54, %56 : vector<8x128xi1>
    %c0_35 = arith.constant 0 : index
    %c0_36 = arith.constant 0 : index
    %58 = vector.load %arg6[%c0_35, %c0_36] : memref<8x128xf32, #tpu.memory_space<vmem>>, vector<8x128xf32>
    %cst_37 = arith.constant 0.000000e+00 : f32
    %59 = vector.broadcast %cst_37 : f32 to vector<8x128xf32>
    %60 = arith.select %57, %52, %59 : vector<8x128xi1>, vector<8x128xf32>
    %61 = arith.addf %58, %60 : vector<8x128xf32>
    %c0_38 = arith.constant 0 : index
    %c0_39 = arith.constant 0 : index
    %62 = vector.load %arg6[%c0_38, %c0_39] : memref<8x128xf32, #tpu.memory_space<vmem>>, vector<8x128xf32>
    tpu.vector_store %arg6[%c0_38, %c0_39], %61 {strides = array<i32>} : memref<8x128xf32, #tpu.memory_space<vmem>>, vector<8x128xf32>,
    %c0_40 = arith.constant 0 : index
    %c0_41 = arith.constant 0 : index
    %63 = vector.load %arg7[%c0_40, %c0_41] : memref<8x128xf32, #tpu.memory_space<vmem>>, vector<8x128xf32>
    %64 = arith.extui %57 : vector<8x128xi1> to vector<8x128xi32>
    %65 = arith.sitofp %64 : vector<8x128xi32> to vector<8x128xf32>
    %66 = arith.addf %63, %65 : vector<8x128xf32>
    %c0_42 = arith.constant 0 : index
    %c0_43 = arith.constant 0 : index
    %67 = vector.load %arg7[%c0_42, %c0_43] : memref<8x128xf32, #tpu.memory_space<vmem>>, vector<8x128xf32>
    tpu.vector_store %arg7[%c0_42, %c0_43], %66 {strides = array<i32>} : memref<8x128xf32, #tpu.memory_space<vmem>>, vector<8x128xf32>,
    %c0_i32_44 = arith.constant 0 : i32
    %68 = arith.cmpi eq, %arg1, %c0_i32_44 : i32
    %69 = arith.extui %68 : i1 to i32
    %c0_i32_45 = arith.constant 0 : i32
    %70 = arith.cmpi ne, %69, %c0_i32_45 : i32
    scf.if %70 {
      %c0_46 = arith.constant 0 : index
      %c0_47 = arith.constant 0 : index
      %71 = vector.load %arg6[%c0_46, %c0_47] : memref<8x128xf32, #tpu.memory_space<vmem>>, vector<8x128xf32>
      %72 = vector.shape_cast %71 : vector<8x128xf32> to vector<1x8x128xf32>
      %cst_48 = arith.constant dense<0.000000e+00> : vector<1xf32>
      %73 = vector.multi_reduction <add>, %72, %cst_48 [1, 2] : vector<1x8x128xf32> to vector<1xf32>
      %74 = vector.shape_cast %73 : vector<1xf32> to vector<1x1x1xf32>
      %75 = vector.extract %74[0, 0, 0] : f32 from vector<1x1x1xf32>
      %76 = vector.broadcast %75 : f32 to vector<1x1xf32>
      %c0_49 = arith.constant 0 : index
      %c0_50 = arith.constant 0 : index
      %c0_51 = arith.constant 0 : index
      %77 = vector.load %arg4[%c0_49, %c0_50, %c0_51] : memref<1x1x1xf32, #tpu.memory_space<vmem>>, vector<1x1x1xf32>
      %78 = vector.shape_cast %77 : vector<1x1x1xf32> to vector<1x1xf32>
      %79 = vector.shape_cast %76 : vector<1x1xf32> to vector<1x1x1xf32>
      tpu.vector_store %arg4[%c0_49, %c0_50, %c0_51], %79 {strides = array<i32>} : memref<1x1x1xf32, #tpu.memory_space<vmem>>, vector<1x1x1xf32>,
      %c0_52 = arith.constant 0 : index
      %c0_53 = arith.constant 0 : index
      %80 = vector.load %arg7[%c0_52, %c0_53] : memref<8x128xf32, #tpu.memory_space<vmem>>, vector<8x128xf32>
      %81 = vector.shape_cast %80 : vector<8x128xf32> to vector<1x8x128xf32>
      %cst_54 = arith.constant dense<0.000000e+00> : vector<1xf32>
      %82 = vector.multi_reduction <add>, %81, %cst_54 [1, 2] : vector<1x8x128xf32> to vector<1xf32>
      %83 = vector.shape_cast %82 : vector<1xf32> to vector<1x1x1xf32>
      %84 = vector.extract %83[0, 0, 0] : f32 from vector<1x1x1xf32>
      %85 = vector.broadcast %84 : f32 to vector<1x1xf32>
      %c0_55 = arith.constant 0 : index
      %c0_56 = arith.constant 0 : index
      %c0_57 = arith.constant 0 : index
      %86 = vector.load %arg5[%c0_55, %c0_56, %c0_57] : memref<1x1x1xf32, #tpu.memory_space<vmem>>, vector<1x1x1xf32>
      %87 = vector.shape_cast %86 : vector<1x1x1xf32> to vector<1x1xf32>
      %88 = vector.shape_cast %85 : vector<1x1xf32> to vector<1x1x1xf32>
      tpu.vector_store %arg5[%c0_55, %c0_56, %c0_57], %88 {strides = array<i32>} : memref<1x1x1xf32, #tpu.memory_space<vmem>>, vector<1x1x1xf32>,
    } else {
    }
    return
  }
  func.func @transform_0(%arg0: i32, %arg1: i32) -> (i32, i32, i32, i32) {
    %c0_i32 = arith.constant 0 : i32
    %c0_i32_0 = arith.constant 0 : i32
    %c0_i32_1 = arith.constant 0 : i32
    return %arg0, %c0_i32, %arg1, %c0_i32_0 : i32, i32, i32, i32
  }
  func.func @transform_1(%arg0: i32, %arg1: i32) -> (i32, i32, i32) {
    %c0_i32 = arith.constant 0 : i32
    %c0_i32_0 = arith.constant 0 : i32
    return %arg0, %arg1, %c0_i32 : i32, i32, i32
  }
  func.func @transform_2(%arg0: i32, %arg1: i32) -> (i32, i32, i32) {
    %c0_i32 = arith.constant 0 : i32
    %c0_i32_0 = arith.constant 0 : i32
    %c0_i32_1 = arith.constant 0 : i32
    return %arg0, %c0_i32, %c0_i32_0 : i32, i32, i32
  }
  func.func @transform_3(%arg0: i32, %arg1: i32) -> (i32, i32, i32) {
    %c0_i32 = arith.constant 0 : i32
    %c0_i32_0 = arith.constant 0 : i32
    %c0_i32_1 = arith.constant 0 : i32
    return %arg0, %c0_i32, %c0_i32_0 : i32, i32, i32
  }
}

</mosaic_0001>

<llo_original>
// kernel: ce_loss.1
$region0: #{ce_loss.1}
  #allocation0 [shape = 'u32[]', space=smem, size = 0x4, offset = 0x4, fixed_abs, tag = 'smem constant byte address 0x4 - core index']
  #allocation1 [shape = 'u32[144,128]{1,0:T(1,128)}', space=vmem, size = 0x12000, scoped, tag = 'internal scratch']
  #allocation2 [shape = 'f32[8,128]{1,0:T(8,128)}', space=vmem, size = 0x1000, scoped, tag = 'scratch operand']
  #allocation3 [shape = 'f32[8,128]{1,0:T(8,128)}', space=vmem, size = 0x1000, scoped, tag = 'scratch operand']
  %s0 = inlined_call_operand.vmem [shape: f32[2,4,8,128], index: 0, kind: input, shape index: {}]
  %s1 = inlined_call_operand.vmem [shape: s32[2,8,128], index: 1, kind: input, shape index: {}]
  %s2 = inlined_call_operand.vmem [shape: f32[2,1,1], index: 2, kind: output, shape index: {0}]
  %s3 = inlined_call_operand.vmem [shape: f32[2,1,1], index: 3, kind: output, shape index: {1}]
  %4 = xla_tuple %s2, %s3
  %s5 = sld [smem:[#allocation0]]
  $region57: #{ce_loss.1} parent=0
    _
  %s7 = ssub.s32 1, %s5
  %s8 = scalar_select 0, %s7, %s5
  loop: start=0, step=1, limit=4
  $region2: #{ce_loss.1} parent=0 // loop_pre_header
    _
  $region3: #{ce_loss.1} parent=0 // loop_header
    %s10 = sphi 0, %s14
    %p11 = scmp.ge.s32.totalorder %s10, 4
    %s17 = sphi 0, %s29
    %s18 = sphi 0, %s25
    %s19 = sphi 0, %s17
    %s20 = sphi 0, %s18
    %s21 = sphi 0, %s19
    %s22 = sphi 0, %s20
    %s34 = sphi 0, %s36
    %s37 = sphi 0, %s34
    %s38 = sphi 0, %s37
    %s54 = sphi 0, %s38
    %s62 = sphi 0, %s64
    %s65 = sphi 0, %s62
    %s66 = sphi 0, %s65
    %s82 = sphi 0, %s66
    %s88 = sphi 0, %s90
    %s91 = sphi 0, %s88
    %s92 = sphi 0, %s91
    %s108 = sphi 0, %s92
    %s114 = sphi 0, %s116
    %s117 = sphi 0, %s114
    %s118 = sphi 0, %s117
    %s134 = sphi 0, %s118
  $region4: #{ce_loss.1} parent=0 // loop_header_branch
    %13 = sbr.rel (%p11) target = $region8
  $region5: #{ce_loss.1} parent=0 // loop_body
    %s15 = ssub.s32 %s10, 1
    %s16 = ssub.s32 %s10, 2
    %s23 = sadd.s32 1, %s18
    %p24 = scmp.ge.s32.totalorder %s23, 1
    %s25 = scalar_select %p24, 0, %s23
    %s26 = sadd.s32 1, %s17
    %s27 = scalar_select %p24, %s26, %s17
    %p28 = scmp.ge.s32.totalorder %s27, 2
    %s29 = scalar_select %p28, 0, %s27
    %s30 = ssub.s32 %s17, %s29
    %s31 = ssub.s32 %s18, %s25
    %s32 = sor.u32 %s30, %s31
    %p33 = scmp.eq.s32.totalorder %s32, 0
    %s35 = sadd.s32 %s34, 1
    %s36 = scalar_select %p33, %s34, %s35
    %p39 = pneg %p33
    %p40 = scmp.eq.s32.totalorder %s10, 1
    %p41 = por %p39, %p40
    %p42 = scmp.ne.s32.totalorder %s34, %s37
    %p43 = scmp.eq.s32.totalorder %s10, 0
    %p44 = por %p42, %p43
    %p45 = scmp.ne.s32.totalorder %s34, %s37
    %p46 = scmp.eq.s32.totalorder %s15, 1
    %p47 = por %p45, %p46
    %p48 = scmp.ne.s32.totalorder %s37, %s38
    %p49 = scmp.eq.s32.totalorder %s15, 0
    %p50 = por %p48, %p49
    %p51 = scmp.ne.s32.totalorder %s37, %s38
    %p52 = scmp.eq.s32.totalorder %s16, 1
    %p53 = por %p51, %p52
    %p55 = scmp.ne.s32.totalorder %s38, %s54
    %p56 = scmp.eq.s32.totalorder %s16, 0
    %p57 = por %p55, %p56
    %s58 = ssub.s32 %s17, %s29
    %s59 = ssub.s32 %s18, %s25
    %s60 = sor.u32 %s58, %s59
    %p61 = scmp.eq.s32.totalorder %s60, 0
    %s63 = sadd.s32 %s62, 1
    %s64 = scalar_select %p61, %s62, %s63
    %p67 = pneg %p61
    %p68 = scmp.eq.s32.totalorder %s10, 1
    %p69 = por %p67, %p68
    %p70 = scmp.ne.s32.totalorder %s62, %s65
    %p71 = scmp.eq.s32.totalorder %s10, 0
    %p72 = por %p70, %p71
    %p73 = scmp.ne.s32.totalorder %s62, %s65
    %p74 = scmp.eq.s32.totalorder %s15, 1
    %p75 = por %p73, %p74
    %p76 = scmp.ne.s32.totalorder %s65, %s66
    %p77 = scmp.eq.s32.totalorder %s15, 0
    %p78 = por %p76, %p77
    %p79 = scmp.ne.s32.totalorder %s65, %s66
    %p80 = scmp.eq.s32.totalorder %s16, 1
    %p81 = por %p79, %p80
    %p83 = scmp.ne.s32.totalorder %s66, %s82
    %p84 = scmp.eq.s32.totalorder %s16, 0
    %p85 = por %p83, %p84
    %s86 = ssub.s32 %s17, %s29
    %p87 = scmp.eq.s32.totalorder %s86, 0
    %s89 = sadd.s32 %s88, 1
    %s90 = scalar_select %p87, %s88, %s89
    %p93 = pneg %p87
    %p94 = scmp.eq.s32.totalorder %s10, 1
    %p95 = por %p93, %p94
    %p96 = scmp.ne.s32.totalorder %s88, %s91
    %p97 = scmp.eq.s32.totalorder %s10, 0
    %p98 = por %p96, %p97
    %p99 = scmp.ne.s32.totalorder %s88, %s91
    %p100 = scmp.eq.s32.totalorder %s15, 1
    %p101 = por %p99, %p100
    %p102 = scmp.ne.s32.totalorder %s91, %s92
    %p103 = scmp.eq.s32.totalorder %s15, 0
    %p104 = por %p102, %p103
    %p105 = scmp.ne.s32.totalorder %s91, %s92
    %p106 = scmp.eq.s32.totalorder %s16, 1
    %p107 = por %p105, %p106
    %p109 = scmp.ne.s32.totalorder %s92, %s108
    %p110 = scmp.eq.s32.totalorder %s16, 0
    %p111 = por %p109, %p110
    %s112 = ssub.s32 %s17, %s29
    %p113 = scmp.eq.s32.totalorder %s112, 0
    %s115 = sadd.s32 %s114, 1
    %s116 = scalar_select %p113, %s114, %s115
    %p119 = pneg %p113
    %p120 = scmp.eq.s32.totalorder %s10, 1
    %p121 = por %p119, %p120
    %p122 = scmp.ne.s32.totalorder %s114, %s117
    %p123 = scmp.eq.s32.totalorder %s10, 0
    %p124 = por %p122, %p123
    %p125 = scmp.ne.s32.totalorder %s114, %s117
    %p126 = scmp.eq.s32.totalorder %s15, 1
    %p127 = por %p125, %p126
    %p128 = scmp.ne.s32.totalorder %s117, %s118
    %p129 = scmp.eq.s32.totalorder %s15, 0
    %p130 = por %p128, %p129
    %p131 = scmp.ne.s32.totalorder %s117, %s118
    %p132 = scmp.eq.s32.totalorder %s16, 1
    %p133 = por %p131, %p132
    %p135 = scmp.ne.s32.totalorder %s118, %s134
    %p136 = scmp.eq.s32.totalorder %s16, 0
    %p137 = por %p135, %p136
    %p138 = scmp.le.s32.totalorder 1, %s10
    %p139 = scmp.lt.s32.totalorder %s10, 3
    %p140 = pnand %p138, %p139
    %p141 = pneg %p140
    // Predicated region
    $region9: #{ce_loss.1} parent=5 // pred_check
      _
    $region10: #{ce_loss.1} parent=5 // pred_check_branch
      %143 = sbr.rel (%p140) target = $region12
    $region11: #{ce_loss.1} parent=5 // pred_region
      %s144 = ssub.s32 %s10, 1
    $region12: #{ce_loss.1} parent=5 // pred_fallthru
      _
    %p145 = scmp.lt.s32.totalorder %s10, 2
    // Predicated region
    $region13: #{ce_loss.1} parent=5 // pred_check
      %p146 = pneg %p145
    $region14: #{ce_loss.1} parent=5 // pred_check_branch
      %148 = sbr.rel (%p146) target = $region16
    $region15: #{ce_loss.1} parent=5 // pred_region
      // Predicated region
      $region17: #{ce_loss.1} parent=15 // pred_check
        %p149 = pneg %p44
      $region18: #{ce_loss.1} parent=15 // pred_check_branch
        %151 = sbr.rel (%p149) target = $region20
      $region19: #{ce_loss.1} parent=15 // pred_region
        %p152 = scmp.lt.s32.totalorder %s17, 1
        %s153 = scalar_select %p152, %s17, 1
        %p154 = scmp.lt.s32.totalorder %s18, 0
        %s155 = scalar_select %p154, %s18, 0
        %s156 = smul.addr %s153, 4
        %s157 = sadd.s32 %s155, %s156
        %s158 = smul.addr %s157, 8
        %s159 = scalar_lea.vmem %s0, %s158
      $region20: #{ce_loss.1} parent=15 // pred_fallthru
        _
      // Predicated region
      $region21: #{ce_loss.1} parent=15 // pred_check
        %p160 = pneg %p72
      $region22: #{ce_loss.1} parent=15 // pred_check_branch
        %162 = sbr.rel (%p160) target = $region24
      $region23: #{ce_loss.1} parent=15 // pred_region
        %p163 = scmp.lt.s32.totalorder %s17, 1
        %s164 = scalar_select %p163, %s17, 1
        %p165 = scmp.lt.s32.totalorder %s18, 0
        %s166 = scalar_select %p165, %s18, 0
        %s167 = sadd.s32 %s166, %s164
        %s168 = smul.addr %s167, 8
        %s169 = scalar_lea.vmem %s1, %s168
      $region24: #{ce_loss.1} parent=15 // pred_fallthru
        _
    $region16: #{ce_loss.1} parent=5 // pred_fallthru
      _
    %p170 = scmp.le.s32.totalorder 1, %s10
    %p171 = scmp.lt.s32.totalorder %s10, 3
    %p172 = pnand %p170, %p171
    %p173 = pneg %p172
    // Predicated region
    $region25: #{ce_loss.1} parent=5 // pred_check
      _
    $region26: #{ce_loss.1} parent=5 // pred_check_branch
      %175 = sbr.rel (%p172) target = $region28
    $region27: #{ce_loss.1} parent=5 // pred_region
      %s176 = ssub.s32 %s10, 1
      %p177 = scmp.lt.s32.totalorder %s19, 1
      %s178 = scalar_select %p177, %s19, 1
      %p179 = scmp.lt.s32.totalorder %s20, 0
      %s180 = scalar_select %p179, %s20, 0
      %s181 = smul.addr %s178, 4
      %s182 = sadd.s32 %s180, %s181
      %s183 = smul.addr %s182, 8
      %s184 = scalar_lea.vmem %s0, %s183
      %p185 = pneg %p50
      %p186 = pneg %p47
      %p187 = scmp.lt.s32.totalorder %s19, 1
      %s188 = scalar_select %p187, %s19, 1
      %p189 = scmp.lt.s32.totalorder %s20, 0
      %s190 = scalar_select %p189, %s20, 0
      %s191 = sadd.s32 %s190, %s188
      %s192 = smul.addr %s191, 8
      %s193 = scalar_lea.vmem %s1, %s192
      %p194 = pneg %p78
      %p195 = pneg %p75
      %p196 = pneg %p104
      %p197 = pneg %p101
      %p198 = scmp.lt.s32.totalorder %s19, 1
      %s199 = scalar_select %p198, %s19, 1
      %s200 = scalar_lea.vmem %s2, %s199
      %p201 = pneg %p130
      %p202 = pneg %p127
      %p203 = scmp.lt.s32.totalorder %s19, 1
      %s204 = scalar_select %p203, %s19, 1
      %s205 = scalar_lea.vmem %s3, %s204
      %p206 = scmp.lt.s32.totalorder %s19, 1
      %s207 = scalar_select %p206, %s19, 1
      %p208 = scmp.lt.s32.totalorder %s20, 0
      %s209 = scalar_select %p208, %s20, 0
      %s210 = smul.addr %s207, 4
      %s211 = sadd.s32 %s209, %s210
      %s212 = smul.addr %s211, 8
      %s213 = scalar_lea.vmem %s0, %s212
      %p214 = scmp.lt.s32.totalorder %s19, 1
      %s215 = scalar_select %p214, %s19, 1
      %p216 = scmp.lt.s32.totalorder %s20, 0
      %s217 = scalar_select %p216, %s20, 0
      %s218 = sadd.s32 %s217, %s215
      %s219 = smul.addr %s218, 8
      %s220 = scalar_lea.vmem %s1, %s219
      %p221 = scmp.lt.s32.totalorder %s19, 1
      %s222 = scalar_select %p221, %s19, 1
      %s223 = scalar_lea.vmem %s2, %s222
      %p224 = scmp.lt.s32.totalorder %s19, 1
      %s225 = scalar_select %p224, %s19, 1
      %s226 = scalar_lea.vmem %s3, %s225
      %p227 = scmp.eq.s32.totalorder %s20, 0
      // Predicated region
      $region29: #{ce_loss.1} parent=27 // pred_check
        %p228 = pneg %p227
      $region30: #{ce_loss.1} parent=27 // pred_check_branch
        %230 = sbr.rel (%p228) target = $region32
      $region31: #{ce_loss.1} parent=27 // pred_region
        %231 = vst [vmem:[#allocation2] sm:$0xff] 0.0
        %232 = vst [vmem:[#allocation3] sm:$0xff] 0.0
      $region32: #{ce_loss.1} parent=27 // pred_fallthru
        _
      %v233 = vld [vmem:[%s220] sm:$0xff]
      %v234 = vld [vmem:[%s213] sm:$0xff]
      %s235 = scalar_lea.vmem %s213, 8
      %v236 = vld [vmem:[%s235] sm:$0xff]
      %v237 = vmax.f32 %v234, %v236
      %s238 = scalar_lea.vmem %s213, 16
      %v239 = vld [vmem:[%s238] sm:$0xff]
      %v240 = vmax.f32 %v237, %v239
      %s241 = scalar_lea.vmem %s213, 24
      %v242 = vld [vmem:[%s241] sm:$0xff]
      %v243 = vmax.f32 %v240, %v242
      %v244 = vsub.f32 %v234, %v243
      %v245 = vmul.f32 %v244, 1.442695
      %v246 = vpow.pop %v245
      %v247 = vadd.f32 %v246, 0.0
      %vm248 = vcmp.eq.s32.totalorder %v233, 0
      %v249 = vsel %vm248, %v234, 0.0
      %v250 = vsub.f32 %v236, %v243
      %v251 = vmul.f32 %v250, 1.442695
      %v252 = vpow.pop %v251
      %v253 = vadd.f32 %v247, %v252
      %vm254 = vcmp.eq.s32.totalorder %v233, 1
      %v255 = vsel %vm254, %v236, %v249
      %v256 = vsub.f32 %v239, %v243
      %v257 = vmul.f32 %v256, 1.442695
      %v258 = vpow.pop %v257
      %v259 = vadd.f32 %v253, %v258
      %vm260 = vcmp.eq.s32.totalorder %v233, 2
      %v261 = vsel %vm260, %v239, %v255
      %v262 = vsub.f32 %v242, %v243
      %v263 = vmul.f32 %v262, 1.442695
      %v264 = vpow.pop %v263
      %v265 = vadd.f32 %v259, %v264
      %vm266 = vcmp.eq.s32.totalorder %v233, 3
      %v267 = vsel %vm266, %v242, %v261
      %v268 = vlog2.pop %v265
      %v269 = vmul.f32 %v268, 0.6931472
      %v270 = vadd.f32 %v243, %v269
      %v271 = vsub.f32 %v270, %v267
      %vm272 = vcmp.ge.s32.totalorder %v233, 0
      %vm273 = vcmp.lt.s32.totalorder %v233, 4
      %vm274 = vmand %vm272, %vm273
      %v275 = vld [vmem:[#allocation2] sm:$0xff]
      %v276 = vsel %vm274, %v271, 0.0
      %v277 = vadd.f32 %v275, %v276
      %278 = vst [vmem:[#allocation2] sm:$0xff] %v277
      %v279 = vld [vmem:[#allocation3] sm:$0xff]
      %v280 = vsel %vm274, 1, 0
      %v281 = vcvt.s32.f32 %v280
      %v282 = vadd.f32 %v279, %v281
      %283 = vst [vmem:[#allocation3] sm:$0xff] %v282
      // Predicated region
      $region33: #{ce_loss.1} parent=27 // pred_check
        %p284 = pneg %p227
      $region34: #{ce_loss.1} parent=27 // pred_check_branch
        %286 = sbr.rel (%p284) target = $region36
      $region35: #{ce_loss.1} parent=27 // pred_region
        %v287 = vld [vmem:[#allocation2] sm:$0xff]
        %288 = vadd.xlane.f32.xlu0 %v287
        %v289 = vpop.xlane.xlu0 %288
        %v290 = vrot.slane %v289, 4
        %v291 = vadd.f32 %v289, %v290
        %v292 = vrot.slane %v291, 2
        %v293 = vadd.f32 %v291, %v292
        %v294 = vrot.slane %v293, 1
        %v295 = vadd.f32 %v293, %v294
        %s296 = vtos %v295
        %v297 = vstv %s296
        %vm298 = vcmask 0
        %299 = vst.msk [vmem:[%s223] sm:$0x1] %vm298, %v297
        %v300 = vld [vmem:[#allocation3] sm:$0xff]
        %301 = vadd.xlane.f32.xlu0 %v300
        %v302 = vpop.xlane.xlu0 %301
        %v303 = vrot.slane %v302, 4
        %v304 = vadd.f32 %v302, %v303
        %v305 = vrot.slane %v304, 2
        %v306 = vadd.f32 %v304, %v305
        %v307 = vrot.slane %v306, 1
        %v308 = vadd.f32 %v306, %v307
        %s309 = vtos %v308
        %v310 = vstv %s309
        %311 = vst.msk [vmem:[%s226] sm:$0x1] %vm298, %v310
      $region36: #{ce_loss.1} parent=27 // pred_fallthru
        _
      %p312 = scmp.lt.s32.totalorder %s19, 1
      %s313 = scalar_select %p312, %s19, 1
      %s314 = scalar_lea.vmem %s2, %s313
      %p315 = scmp.lt.s32.totalorder %s19, 1
      %s316 = scalar_select %p315, %s19, 1
      %s317 = scalar_lea.vmem %s3, %s316
      // Predicated region
      $region37: #{ce_loss.1} parent=27 // pred_check
        %p318 = pneg %p101
      $region38: #{ce_loss.1} parent=27 // pred_check_branch
        %320 = sbr.rel (%p318) target = $region40
      $region39: #{ce_loss.1} parent=27 // pred_region
        _
      $region40: #{ce_loss.1} parent=27 // pred_fallthru
        _
      // Predicated region
      $region41: #{ce_loss.1} parent=27 // pred_check
        %p321 = pneg %p127
      $region42: #{ce_loss.1} parent=27 // pred_check_branch
        %323 = sbr.rel (%p321) target = $region44
      $region43: #{ce_loss.1} parent=27 // pred_region
        _
      $region44: #{ce_loss.1} parent=27 // pred_fallthru
        _
    $region28: #{ce_loss.1} parent=5 // pred_fallthru
      _
    %p324 = scmp.le.s32.totalorder 2, %s10
    // Predicated region
    $region45: #{ce_loss.1} parent=5 // pred_check
      %p325 = pneg %p324
    $region46: #{ce_loss.1} parent=5 // pred_check_branch
      %327 = sbr.rel (%p325) target = $region48
    $region47: #{ce_loss.1} parent=5 // pred_region
      %s328 = ssub.s32 %s10, 2
      // Predicated region
      $region49: #{ce_loss.1} parent=47 // pred_check
        %p329 = pneg %p107
      $region50: #{ce_loss.1} parent=47 // pred_check_branch
        %331 = sbr.rel (%p329) target = $region52
      $region51: #{ce_loss.1} parent=47 // pred_region
        %p332 = scmp.lt.s32.totalorder %s21, 1
        %s333 = scalar_select %p332, %s21, 1
        %s334 = scalar_lea.vmem %s2, %s333
      $region52: #{ce_loss.1} parent=47 // pred_fallthru
        _
      // Predicated region
      $region53: #{ce_loss.1} parent=47 // pred_check
        %p335 = pneg %p133
      $region54: #{ce_loss.1} parent=47 // pred_check_branch
        %337 = sbr.rel (%p335) target = $region56
      $region55: #{ce_loss.1} parent=47 // pred_region
        %p338 = scmp.lt.s32.totalorder %s21, 1
        %s339 = scalar_select %p338, %s21, 1
        %s340 = scalar_lea.vmem %s3, %s339
      $region56: #{ce_loss.1} parent=47 // pred_fallthru
        _
    $region48: #{ce_loss.1} parent=5 // pred_fallthru
      _
  $region6: #{ce_loss.1} parent=0 // loop_footer
    %s14 = sadd.s32 1, %s10
  $region7: #{ce_loss.1} parent=0 // loop_footer_branch
    %9 = sbr.rel target = $region3
  $region8: #{ce_loss.1} parent=0 // loop_exit
    _

</llo_original>
